<compile_context>
chip_gen: v7x
topology: tpu7x:2x2x1
jax: 0.10.0
libtpu: 0.0.40
codegen_flags: <defaults>
</compile_context>

<pallas_src>
import functools

import jax
import jax.numpy as jnp
import numpy as np
from jax.experimental import pallas as pl
from jax.experimental.pallas import tpu as pltpu


def _pool_mlp_kernel(x_ref, w1_ref, b1_ref, w2_ref, b2_ref, gate_ref, acc_ref,
                     *, inv_hw):
    """Streaming global-avg-pool + (1x1 conv -> relu -> 1x1 conv -> sigmoid)."""
    s = pl.program_id(0)

    @pl.when(s == 0)
    def _():
        acc_ref[...] = jnp.zeros_like(acc_ref)

    # x tile: [N, C, tS]; accumulate per-channel sums over the lane axis.
    acc_ref[...] += jnp.sum(x_ref[...], axis=-1)

    @pl.when(s == pl.num_programs(0) - 1)
    def _():
        mean = acc_ref[...] * inv_hw                                   # [N, C]
        z = jnp.dot(mean, w1_ref[...], preferred_element_type=jnp.float32)
        z = jnp.maximum(z + b1_ref[...], 0.0)                          # ReLU
        z = jnp.dot(z, w2_ref[...], preferred_element_type=jnp.float32)
        gate_ref[...] = jax.nn.sigmoid(z + b2_ref[...])                # [N, C]


def _scale_kernel(x_ref, gate_ref, o_ref):
    """out = x * gate, gate lane-broadcast over the spatial tile."""
    o_ref[...] = x_ref[...] * gate_ref[...][:, :, None]


def _choose_tile(hw):
    """Lane-dense spatial tile (multiple of 128), >=2 pipeline steps when possible."""
    t = 512
    while t > 128 and hw <= t:
        t //= 2
    return t


def gab_forward(x, conv1_w, conv1_b, conv2_w, conv2_b):
    """GAB forward. x: [N, C, H, W] f32; conv weights in PyTorch OIHW layout
    ([C//r, C, 1, 1] and [C, C//r, 1, 1]); biases 1-D."""
    N, C, H, W = x.shape
    Cr = conv1_w.shape[0]
    hw = H * W

    # Fold the 1x1 convs into plain matmul layouts (host-side, free).
    w1 = conv1_w.reshape(Cr, C).T            # [C, Cr]
    w2 = conv2_w.reshape(C, Cr).T            # [Cr, C]
    b1 = conv1_b.reshape(1, Cr)
    b2 = conv2_b.reshape(1, C)

    # View NCHW as [N, C, HW] (free); zero-pad the lane (spatial) dim to a
    # multiple of the tile.  Padded zeros do not perturb the sum and padded
    # output columns are sliced off below.
    xf = x.reshape(N, C, hw)
    t = _choose_tile(hw)
    hw_pad = ((hw + t - 1) // t) * t
    if hw_pad != hw:
        xf = jnp.pad(xf, ((0, 0), (0, 0), (0, hw_pad - hw)))
    n_tiles = hw_pad // t

    # ---- Pass 1: global average pool + squeeze/excite MLP -> gate [N, C] ----
    gate = pl.pallas_call(
        functools.partial(_pool_mlp_kernel, inv_hw=1.0 / hw),
        out_shape=jax.ShapeDtypeStruct((N, C), jnp.float32),
        grid_spec=pltpu.PrefetchScalarGridSpec(
            num_scalar_prefetch=0,
            grid=(n_tiles,),
            in_specs=[
                pl.BlockSpec((N, C, t), lambda s: (0, 0, s)),   # x tiles
                pl.BlockSpec((C, Cr), lambda s: (0, 0)),        # w1 (resident)
                pl.BlockSpec((1, Cr), lambda s: (0, 0)),        # b1
                pl.BlockSpec((Cr, C), lambda s: (0, 0)),        # w2
                pl.BlockSpec((1, C), lambda s: (0, 0)),         # b2
            ],
            out_specs=pl.BlockSpec((N, C), lambda s: (0, 0)),
            scratch_shapes=[pltpu.VMEM((N, C), jnp.float32)],
        ),
        compiler_params=pltpu.CompilerParams(
            dimension_semantics=("arbitrary",)),                # reduction axis
    )(xf, w1, b1, w2, b2)

    # ---- Pass 2: stream x again and apply the per-channel gate -------------
    out = pl.pallas_call(
        _scale_kernel,
        out_shape=jax.ShapeDtypeStruct((N, C, hw_pad), jnp.float32),
        grid_spec=pltpu.PrefetchScalarGridSpec(
            num_scalar_prefetch=0,
            grid=(n_tiles,),
            in_specs=[
                pl.BlockSpec((N, C, t), lambda s: (0, 0, s)),   # x tiles
                pl.BlockSpec((N, C), lambda s: (0, 0)),         # gate (resident)
            ],
            out_specs=pl.BlockSpec((N, C, t), lambda s: (0, 0, s)),
        ),
        compiler_params=pltpu.CompilerParams(
            dimension_semantics=("parallel",)),                 # independent tiles
    )(xf, gate)

    return out[:, :, :hw].reshape(N, C, H, W)


def reference_forward(x, c1w, c1b, c2w, c2b):
    """Pure-JAX reference mirroring the PyTorch module exactly."""
    z = jnp.mean(x, axis=(2, 3), keepdims=True)                 # [N, C, 1, 1]
    z = jax.lax.conv_general_dilated(
        z, c1w, (1, 1), 'VALID', dimension_numbers=('NCHW', 'OIHW', 'NCHW'))
    z = jnp.maximum(z + c1b[None, :, None, None], 0.0)
    z = jax.lax.conv_general_dilated(
        z, c2w, (1, 1), 'VALID', dimension_numbers=('NCHW', 'OIHW', 'NCHW'))
    z = jax.nn.sigmoid(z + c2b[None, :, None, None])
    return x * z


if __name__ == "__main__":
    key = jax.random.PRNGKey(0)
    k = jax.random.split(key, 5)

    # GAB(input_dim=32, reduction=4) on a [2, 32, 16, 16] feature map.
    N, C, H, W = 2, 32, 16, 16
    reduction = 4
    Cr = C // reduction

    x = jax.random.normal(k[0], (N, C, H, W), jnp.float32)
    conv1_w = jax.random.normal(k[1], (Cr, C, 1, 1), jnp.float32) * 0.1
    conv1_b = jax.random.normal(k[2], (Cr,), jnp.float32) * 0.1
    conv2_w = jax.random.normal(k[3], (C, Cr, 1, 1), jnp.float32) * 0.1
    conv2_b = jax.random.normal(k[4], (C,), jnp.float32) * 0.1

    out = gab_forward(x, conv1_w, conv1_b, conv2_w, conv2_b)
    out = jax.block_until_ready(out)
    assert out.shape == (N, C, H, W), out.shape

    ref = reference_forward(x, conv1_w, conv1_b, conv2_w, conv2_b)
    np.testing.assert_allclose(np.asarray(out), np.asarray(ref),
                               rtol=1e-3, atol=1e-3)
    print("KERNEL_OK")
</pallas_src>

<mosaic_0001>
module attributes {stable_mosaic.version = 11 : i64} {
  func.func @_pool_mlp_kernel(%arg0: i32, %arg1: memref<2x32x128xf32, #tpu.memory_space<vmem>>, %arg2: memref<32x8xf32, #tpu.memory_space<vmem>>, %arg3: memref<1x8xf32, #tpu.memory_space<vmem>>, %arg4: memref<8x32xf32, #tpu.memory_space<vmem>>, %arg5: memref<1x32xf32, #tpu.memory_space<vmem>>, %arg6: memref<2x32xf32, #tpu.memory_space<vmem>>, %arg7: memref<2x32xf32, #tpu.memory_space<vmem>>) attributes {dimension_semantics = [#tpu.dimension_semantics<arbitrary>], iteration_bounds = array<i64: 2>, scalar_prefetch = 0 : i64, scratch_operands = 1 : i64, tpu.core_type = #tpu.core_type<tc>, window_params = [{transform_indices = @transform_0, window_bounds = array<i64: 2, 32, 128>}, {pipeline_mode = #tpu.pipeline_mode<synchronous>, transform_indices = @transform_1, window_bounds = array<i64: 32, 8>}, {pipeline_mode = #tpu.pipeline_mode<synchronous>, transform_indices = @transform_2, window_bounds = array<i64: 1, 8>}, {pipeline_mode = #tpu.pipeline_mode<synchronous>, transform_indices = @transform_3, window_bounds = array<i64: 8, 32>}, {pipeline_mode = #tpu.pipeline_mode<synchronous>, transform_indices = @transform_4, window_bounds = array<i64: 1, 32>}, {pipeline_mode = #tpu.pipeline_mode<synchronous>, transform_indices = @transform_5, window_bounds = array<i64: 2, 32>}]} {
    %c0_i32 = arith.constant 0 : i32
    %0 = arith.cmpi eq, %arg0, %c0_i32 : i32
    %1 = arith.extui %0 : i1 to i32
    %c0_i32_0 = arith.constant 0 : i32
    %2 = arith.cmpi ne, %1, %c0_i32_0 : i32
    scf.if %2 {
      %cst_8 = arith.constant 0.000000e+00 : f32
      %11 = vector.broadcast %cst_8 : f32 to vector<2x32xf32>
      %c0_9 = arith.constant 0 : index
      %c0_10 = arith.constant 0 : index
      %12 = vector.load %arg7[%c0_9, %c0_10] : memref<2x32xf32, #tpu.memory_space<vmem>>, vector<2x32xf32>
      tpu.vector_store %arg7[%c0_9, %c0_10], %11 {strides = array<i32>} : memref<2x32xf32, #tpu.memory_space<vmem>>, vector<2x32xf32>,
    } else {
    }
    %c0 = arith.constant 0 : index
    %c0_1 = arith.constant 0 : index
    %3 = vector.load %arg7[%c0, %c0_1] : memref<2x32xf32, #tpu.memory_space<vmem>>, vector<2x32xf32>
    %c0_2 = arith.constant 0 : index
    %c0_3 = arith.constant 0 : index
    %c0_4 = arith.constant 0 : index
    %4 = vector.load %arg1[%c0_2, %c0_3, %c0_4] : memref<2x32x128xf32, #tpu.memory_space<vmem>>, vector<2x32x128xf32>
    %cst = arith.constant dense<0.000000e+00> : vector<2x32xf32>
    %5 = vector.multi_reduction <add>, %4, %cst [2] : vector<2x32x128xf32> to vector<2x32xf32>
    %6 = arith.addf %3, %5 : vector<2x32xf32>
    %c0_5 = arith.constant 0 : index
    %c0_6 = arith.constant 0 : index
    %7 = vector.load %arg7[%c0_5, %c0_6] : memref<2x32xf32, #tpu.memory_space<vmem>>, vector<2x32xf32>
    tpu.vector_store %arg7[%c0_5, %c0_6], %6 {strides = array<i32>} : memref<2x32xf32, #tpu.memory_space<vmem>>, vector<2x32xf32>,
    %c1_i32 = arith.constant 1 : i32
    %8 = arith.cmpi eq, %arg0, %c1_i32 : i32
    %9 = arith.extui %8 : i1 to i32
    %c0_i32_7 = arith.constant 0 : i32
    %10 = arith.cmpi ne, %9, %c0_i32_7 : i32
    scf.if %10 {
      %c0_8 = arith.constant 0 : index
      %c0_9 = arith.constant 0 : index
      %11 = vector.load %arg7[%c0_8, %c0_9] : memref<2x32xf32, #tpu.memory_space<vmem>>, vector<2x32xf32>
      %cst_10 = arith.constant 3.906250e-03 : f32
      %12 = vector.broadcast %cst_10 : f32 to vector<2x32xf32>
      %13 = arith.mulf %11, %12 : vector<2x32xf32>
      %c0_11 = arith.constant 0 : index
      %c0_12 = arith.constant 0 : index
      %14 = vector.load %arg2[%c0_11, %c0_12] : memref<32x8xf32, #tpu.memory_space<vmem>>, vector<32x8xf32>
      %cst_13 = arith.constant dense<0.000000e+00> : vector<2x8xf32>
      %15 = tpu.matmul %13, %14, %cst_13 {dimension_numbers = #tpu.dot_dimension_numbers<[1], [0], [0], [1], [0, 0, 1, 1], [], []>} : vector<2x32xf32>, vector<32x8xf32>, vector<2x8xf32> -> vector<2x8xf32>
      %c0_14 = arith.constant 0 : index
      %c0_15 = arith.constant 0 : index
      %16 = vector.load %arg3[%c0_14, %c0_15] : memref<1x8xf32, #tpu.memory_space<vmem>>, vector<1x8xf32>
      %17 = vector.broadcast %16 : vector<1x8xf32> to vector<2x8xf32>
      %18 = arith.addf %15, %17 : vector<2x8xf32>
      %cst_16 = arith.constant 0.000000e+00 : f32
      %19 = vector.broadcast %cst_16 : f32 to vector<2x8xf32>
      %20 = arith.maximumf %18, %19 : vector<2x8xf32>
      %c0_17 = arith.constant 0 : index
      %c0_18 = arith.constant 0 : index
      %21 = vector.load %arg4[%c0_17, %c0_18] : memref<8x32xf32, #tpu.memory_space<vmem>>, vector<8x32xf32>
      %cst_19 = arith.constant dense<0.000000e+00> : vector<2x32xf32>
      %22 = tpu.matmul %20, %21, %cst_19 {dimension_numbers = #tpu.dot_dimension_numbers<[1], [0], [0], [1], [0, 0, 1, 1], [], []>} : vector<2x8xf32>, vector<8x32xf32>, vector<2x32xf32> -> vector<2x32xf32>
      %c0_20 = arith.constant 0 : index
      %c0_21 = arith.constant 0 : index
      %23 = vector.load %arg5[%c0_20, %c0_21] : memref<1x32xf32, #tpu.memory_space<vmem>>, vector<1x32xf32>
      %24 = vector.broadcast %23 : vector<1x32xf32> to vector<2x32xf32>
      %25 = arith.addf %22, %24 : vector<2x32xf32>
      %26 = arith.negf %25 : vector<2x32xf32>
      %27 = math.exp %26 : vector<2x32xf32>
      %cst_22 = arith.constant 1.000000e+00 : f32
      %28 = vector.broadcast %cst_22 : f32 to vector<2x32xf32>
      %29 = arith.addf %28, %27 : vector<2x32xf32>
      %30 = arith.divf %28, %29 : vector<2x32xf32>
      %c0_23 = arith.constant 0 : index
      %c0_24 = arith.constant 0 : index
      %31 = vector.load %arg6[%c0_23, %c0_24] : memref<2x32xf32, #tpu.memory_space<vmem>>, vector<2x32xf32>
      tpu.vector_store %arg6[%c0_23, %c0_24], %30 {strides = array<i32>} : memref<2x32xf32, #tpu.memory_space<vmem>>, vector<2x32xf32>,
    } else {
    }
    return
  }
  func.func @transform_0(%arg0: i32) -> (i32, i32, i32) {
    %c0_i32 = arith.constant 0 : i32
    %c0_i32_0 = arith.constant 0 : i32
    %c0_i32_1 = arith.constant 0 : i32
    return %c0_i32, %c0_i32_0, %arg0 : i32, i32, i32
  }
  func.func @transform_1(%arg0: i32) -> (i32, i32) {
    %c0_i32 = arith.constant 0 : i32
    %c0_i32_0 = arith.constant 0 : i32
    %c0_i32_1 = arith.constant 0 : i32
    return %c0_i32, %c0_i32_0 : i32, i32
  }
  func.func @transform_2(%arg0: i32) -> (i32, i32) {
    %c0_i32 = arith.constant 0 : i32
    %c0_i32_0 = arith.constant 0 : i32
    %c0_i32_1 = arith.constant 0 : i32
    return %c0_i32, %c0_i32_0 : i32, i32
  }
  func.func @transform_3(%arg0: i32) -> (i32, i32) {
    %c0_i32 = arith.constant 0 : i32
    %c0_i32_0 = arith.constant 0 : i32
    %c0_i32_1 = arith.constant 0 : i32
    return %c0_i32, %c0_i32_0 : i32, i32
  }
  func.func @transform_4(%arg0: i32) -> (i32, i32) {
    %c0_i32 = arith.constant 0 : i32
    %c0_i32_0 = arith.constant 0 : i32
    %c0_i32_1 = arith.constant 0 : i32
    return %c0_i32, %c0_i32_0 : i32, i32
  }
  func.func @transform_5(%arg0: i32) -> (i32, i32) {
    %c0_i32 = arith.constant 0 : i32
    %c0_i32_0 = arith.constant 0 : i32
    %c0_i32_1 = arith.constant 0 : i32
    return %c0_i32, %c0_i32_0 : i32, i32
  }
}

</mosaic_0001>

<llo_original>
// kernel: tpu_custom_call.1
$region0: #{tpu_custom_call.1}
  #allocation0 [shape = 'u32[]', space=smem, size = 0x4, offset = 0x4, fixed_abs, tag = 'smem constant byte address 0x4 - core index']
  #allocation1 [shape = 'u32[144,128]{1,0:T(1,128)}', space=vmem, size = 0x12000, scoped, tag = 'internal scratch']
  #allocation2 [shape = 'f32[2,32]{1,0:T(2,128)}', space=vmem, size = 0x400, scoped, tag = 'scratch operand']
  %s0 = inlined_call_operand.hbm [shape: f32[2,32,256], index: 0, kind: input, shape index: {}]
  %s1 = inlined_call_operand.vmem [shape: f32[32,8], index: 1, kind: input, shape index: {}]
  %s2 = inlined_call_operand.vmem [shape: f32[1,8], index: 2, kind: input, shape index: {}]
  %s3 = inlined_call_operand.vmem [shape: f32[8,32], index: 3, kind: input, shape index: {}]
  %s4 = inlined_call_operand.vmem [shape: f32[1,32], index: 4, kind: input, shape index: {}]
  %s5 = inlined_call_operand.hbm [shape: f32[2,32], index: 5, kind: output, shape index: {}]
  %s6 = sld [smem:[#allocation0]]
  $region65: #{tpu_custom_call.1} parent=0
    _
  %s8 = ssub.s32 1, %s6
  %s9 = scalar_select 0, %s8, %s6
  $region1: #{tpu_custom_call.1} parent=0
    #allocation3 [shape = 'u8[65536]{0}', space=vmem, size = 0x10000, scoped, tag = 'input window, operand 0']
    #allocation4 [shape = 's32[2]{0}', space=sflag, size = 0x8, scoped, tag = 'scoped memory for tpu_custom_call.1']
    #allocation5 [shape = 's32[2]{0}', space=sflag, size = 0x8, scoped, tag = 'scoped memory for tpu_custom_call.1']
    #allocation6 [shape = 'u8[1024]{0}', space=vmem, size = 0x400, scoped, tag = 'output window, operand 0, single buffered']
    %10 = vsyncpa [#allocation4], 0
    %s11 = scalar_lea.sflag [#allocation4], 1
    %12 = vsyncpa %s11, 0
    %13 = vsyncpa [#allocation5], 0
    loop: start=0, step=1, limit=4
    $region2: #{tpu_custom_call.1} parent=1 // loop_pre_header
      _
    $region3: #{tpu_custom_call.1} parent=1 // loop_header
      %s15 = sphi 0, %s19
      %p16 = scmp.ge.s32.totalorder %s15, 4
      %s25 = sphi 0, %s27
      %s28 = sphi 0, %s25
      %s29 = sphi 0, %s28
      %s45 = sphi 0, %s29
      %s49 = sphi 0, %s49
      %s51 = sphi 0, %s49
      %s52 = sphi 0, %s51
      %s66 = sphi 0, %s52
      %s70 = sphi 0, %s70
      %s72 = sphi 0, %s70
      %s73 = sphi 0, %s72
      %s87 = sphi 0, %s73
      %s91 = sphi 0, %s91
      %s93 = sphi 0, %s91
      %s94 = sphi 0, %s93
      %s108 = sphi 0, %s94
      %s112 = sphi 0, %s112
      %s114 = sphi 0, %s112
      %s115 = sphi 0, %s114
      %s129 = sphi 0, %s115
      %s133 = sphi 0, %s133
      %s135 = sphi 0, %s133
      %s136 = sphi 0, %s135
      %s150 = sphi 0, %s136
    $region4: #{tpu_custom_call.1} parent=1 // loop_header_branch
      %18 = sbr.rel (%p16) target = $region8
    $region5: #{tpu_custom_call.1} parent=1 // loop_body
      %s20 = ssub.s32 %s15, 1
      %s21 = ssub.s32 %s15, 2
      %s22 = sadd.s32 %s15, 1
      %s23 = ssub.s32 %s15, %s22
      %p24 = scmp.eq.s32.totalorder %s23, 0
      %s26 = sadd.s32 %s25, 1
      %s27 = scalar_select %p24, %s25, %s26
      %p30 = pneg %p24
      %p31 = scmp.eq.s32.totalorder %s15, 1
      %p32 = por %p30, %p31
      %p33 = scmp.ne.s32.totalorder %s25, %s28
      %p34 = scmp.eq.s32.totalorder %s15, 0
      %p35 = por %p33, %p34
      %p36 = scmp.ne.s32.totalorder %s25, %s28
      %p37 = scmp.eq.s32.totalorder %s20, 1
      %p38 = por %p36, %p37
      %p39 = scmp.ne.s32.totalorder %s28, %s29
      %p40 = scmp.eq.s32.totalorder %s20, 0
      %p41 = por %p39, %p40
      %p42 = scmp.ne.s32.totalorder %s28, %s29
      %p43 = scmp.eq.s32.totalorder %s21, 1
      %p44 = por %p42, %p43
      %p46 = scmp.ne.s32.totalorder %s29, %s45
      %p47 = scmp.eq.s32.totalorder %s21, 0
      %p48 = por %p46, %p47
      %s50 = sadd.s32 %s49, 1
      %p53 = scmp.eq.s32.totalorder %s15, 1
      %p54 = scmp.ne.s32.totalorder %s49, %s51
      %p55 = scmp.eq.s32.totalorder %s15, 0
      %p56 = por %p54, %p55
      %p57 = scmp.ne.s32.totalorder %s49, %s51
      %p58 = scmp.eq.s32.totalorder %s20, 1
      %p59 = por %p57, %p58
      %p60 = scmp.ne.s32.totalorder %s51, %s52
      %p61 = scmp.eq.s32.totalorder %s20, 0
      %p62 = por %p60, %p61
      %p63 = scmp.ne.s32.totalorder %s51, %s52
      %p64 = scmp.eq.s32.totalorder %s21, 1
      %p65 = por %p63, %p64
      %p67 = scmp.ne.s32.totalorder %s52, %s66
      %p68 = scmp.eq.s32.totalorder %s21, 0
      %p69 = por %p67, %p68
      %s71 = sadd.s32 %s70, 1
      %p74 = scmp.eq.s32.totalorder %s15, 1
      %p75 = scmp.ne.s32.totalorder %s70, %s72
      %p76 = scmp.eq.s32.totalorder %s15, 0
      %p77 = por %p75, %p76
      %p78 = scmp.ne.s32.totalorder %s70, %s72
      %p79 = scmp.eq.s32.totalorder %s20, 1
      %p80 = por %p78, %p79
      %p81 = scmp.ne.s32.totalorder %s72, %s73
      %p82 = scmp.eq.s32.totalorder %s20, 0
      %p83 = por %p81, %p82
      %p84 = scmp.ne.s32.totalorder %s72, %s73
      %p85 = scmp.eq.s32.totalorder %s21, 1
      %p86 = por %p84, %p85
      %p88 = scmp.ne.s32.totalorder %s73, %s87
      %p89 = scmp.eq.s32.totalorder %s21, 0
      %p90 = por %p88, %p89
      %s92 = sadd.s32 %s91, 1
      %p95 = scmp.eq.s32.totalorder %s15, 1
      %p96 = scmp.ne.s32.totalorder %s91, %s93
      %p97 = scmp.eq.s32.totalorder %s15, 0
      %p98 = por %p96, %p97
      %p99 = scmp.ne.s32.totalorder %s91, %s93
      %p100 = scmp.eq.s32.totalorder %s20, 1
      %p101 = por %p99, %p100
      %p102 = scmp.ne.s32.totalorder %s93, %s94
      %p103 = scmp.eq.s32.totalorder %s20, 0
      %p104 = por %p102, %p103
      %p105 = scmp.ne.s32.totalorder %s93, %s94
      %p106 = scmp.eq.s32.totalorder %s21, 1
      %p107 = por %p105, %p106
      %p109 = scmp.ne.s32.totalorder %s94, %s108
      %p110 = scmp.eq.s32.totalorder %s21, 0
      %p111 = por %p109, %p110
      %s113 = sadd.s32 %s112, 1
      %p116 = scmp.eq.s32.totalorder %s15, 1
      %p117 = scmp.ne.s32.totalorder %s112, %s114
      %p118 = scmp.eq.s32.totalorder %s15, 0
      %p119 = por %p117, %p118
      %p120 = scmp.ne.s32.totalorder %s112, %s114
      %p121 = scmp.eq.s32.totalorder %s20, 1
      %p122 = por %p120, %p121
      %p123 = scmp.ne.s32.totalorder %s114, %s115
      %p124 = scmp.eq.s32.totalorder %s20, 0
      %p125 = por %p123, %p124
      %p126 = scmp.ne.s32.totalorder %s114, %s115
      %p127 = scmp.eq.s32.totalorder %s21, 1
      %p128 = por %p126, %p127
      %p130 = scmp.ne.s32.totalorder %s115, %s129
      %p131 = scmp.eq.s32.totalorder %s21, 0
      %p132 = por %p130, %p131
      %s134 = sadd.s32 %s133, 1
      %p137 = scmp.eq.s32.totalorder %s15, 1
      %p138 = scmp.ne.s32.totalorder %s133, %s135
      %p139 = scmp.eq.s32.totalorder %s15, 0
      %p140 = por %p138, %p139
      %p141 = scmp.ne.s32.totalorder %s133, %s135
      %p142 = scmp.eq.s32.totalorder %s20, 1
      %p143 = por %p141, %p142
      %p144 = scmp.ne.s32.totalorder %s135, %s136
      %p145 = scmp.eq.s32.totalorder %s20, 0
      %p146 = por %p144, %p145
      %p147 = scmp.ne.s32.totalorder %s135, %s136
      %p148 = scmp.eq.s32.totalorder %s21, 1
      %p149 = por %p147, %p148
      %p151 = scmp.ne.s32.totalorder %s136, %s150
      %p152 = scmp.eq.s32.totalorder %s21, 0
      %p153 = por %p151, %p152
      %p154 = scmp.le.s32.totalorder 1, %s15
      %p155 = scmp.lt.s32.totalorder %s15, 3
      %p156 = pnand %p154, %p155
      %p157 = pneg %p156
      // Predicated region
      $region9: #{tpu_custom_call.1} parent=5 // pred_check
        _
      $region10: #{tpu_custom_call.1} parent=5 // pred_check_branch
        %159 = sbr.rel (%p156) target = $region12
      $region11: #{tpu_custom_call.1} parent=5 // pred_region
        %s160 = ssub.s32 %s15, 1
        // Predicated region
        $region13: #{tpu_custom_call.1} parent=11 // pred_check
          %p161 = pneg %p62
        $region14: #{tpu_custom_call.1} parent=11 // pred_check_branch
          %163 = sbr.rel (%p161) target = $region16
        $region15: #{tpu_custom_call.1} parent=11 // pred_region
          _
        $region16: #{tpu_custom_call.1} parent=11 // pred_fallthru
          _
        // Predicated region
        $region17: #{tpu_custom_call.1} parent=11 // pred_check
          %p164 = pneg %p83
        $region18: #{tpu_custom_call.1} parent=11 // pred_check_branch
          %166 = sbr.rel (%p164) target = $region20
        $region19: #{tpu_custom_call.1} parent=11 // pred_region
          _
        $region20: #{tpu_custom_call.1} parent=11 // pred_fallthru
          _
        // Predicated region
        $region21: #{tpu_custom_call.1} parent=11 // pred_check
          %p167 = pneg %p104
        $region22: #{tpu_custom_call.1} parent=11 // pred_check_branch
          %169 = sbr.rel (%p167) target = $region24
        $region23: #{tpu_custom_call.1} parent=11 // pred_region
          _
        $region24: #{tpu_custom_call.1} parent=11 // pred_fallthru
          _
        // Predicated region
        $region25: #{tpu_custom_call.1} parent=11 // pred_check
          %p170 = pneg %p125
        $region26: #{tpu_custom_call.1} parent=11 // pred_check_branch
          %172 = sbr.rel (%p170) target = $region28
        $region27: #{tpu_custom_call.1} parent=11 // pred_region
          _
        $region28: #{tpu_custom_call.1} parent=11 // pred_fallthru
          _
      $region12: #{tpu_custom_call.1} parent=5 // pred_fallthru
        _
      %p173 = scmp.lt.s32.totalorder %s15, 2
      // Predicated region
      $region29: #{tpu_custom_call.1} parent=5 // pred_check
        %p174 = pneg %p173
      $region30: #{tpu_custom_call.1} parent=5 // pred_check_branch
        %176 = sbr.rel (%p174) target = $region32
      $region31: #{tpu_custom_call.1} parent=5 // pred_region
        // Predicated region
        $region33: #{tpu_custom_call.1} parent=31 // pred_check
          %p177 = pneg %p35
        $region34: #{tpu_custom_call.1} parent=31 // pred_check_branch
          %179 = sbr.rel (%p177) target = $region36
        $region35: #{tpu_custom_call.1} parent=31 // pred_region
          %s180 = sand.u32 %s25, 1
          %s181 = scalar_lea.sflag [#allocation4], %s180
          %s182 = sand.u32 %s25, 1
          %s183 = smul.addr %s182, 64
          %s184 = scalar_lea.vmem [#allocation3], %s183
          %s186 = ssub.s32 1024, 1024
          %187 = vsyncadd %s181, %s186
          %s188 = smul.addr %s15, 128
          %s189 = scalar_lea.hbm %s0, %s188
          %s190 = sshll.u32 %s184, 4
          %s191 = int_to_ptr.vmem [resolvable:$true] %s190
          %196 = dma.hbm_to_vmem [thread:$0]  %s189, 1024, %s191, %s181, 256, 128, 8
        $region36: #{tpu_custom_call.1} parent=31 // pred_fallthru
          _
      $region32: #{tpu_custom_call.1} parent=5 // pred_fallthru
        _
      %p197 = scmp.le.s32.totalorder 1, %s15
      %p198 = scmp.lt.s32.totalorder %s15, 3
      %p199 = pnand %p197, %p198
      %p200 = pneg %p199
      // Predicated region
      $region37: #{tpu_custom_call.1} parent=5 // pred_check
        _
      $region38: #{tpu_custom_call.1} parent=5 // pred_check_branch
        %202 = sbr.rel (%p199) target = $region40
      $region39: #{tpu_custom_call.1} parent=5 // pred_region
        %s203 = ssub.s32 %s15, 1
        %s204 = sand.u32 %s28, 1
        %s205 = scalar_lea.sflag [#allocation4], %s204
        %s206 = sand.u32 %s28, 1
        %s207 = smul.addr %s206, 64
        %s208 = scalar_lea.vmem [#allocation3], %s207
        // Predicated region
        $region41: #{tpu_custom_call.1} parent=39 // pred_check
          %p209 = pneg %p41
        $region42: #{tpu_custom_call.1} parent=39 // pred_check_branch
          %211 = sbr.rel (%p209) target = $region44
        $region43: #{tpu_custom_call.1} parent=39 // pred_region
          %212 = dma.done %s205, 1024
        $region44: #{tpu_custom_call.1} parent=39 // pred_fallthru
          _
        %s213 = sand.u32 %s28, 1
        %s214 = scalar_lea.sflag [#allocation4], %s213
        %s215 = sand.u32 %s28, 1
        %s216 = smul.addr %s215, 64
        %s217 = scalar_lea.vmem [#allocation3], %s216
        %p218 = pneg %p41
        %p219 = pneg %p38
        %p220 = pneg %p62
        %p221 = pneg %p59
        %p222 = pneg %p83
        %p223 = pneg %p80
        %p224 = pneg %p104
        %p225 = pneg %p101
        %p226 = pneg %p125
        %p227 = pneg %p122
        %p228 = pneg %p146
        %p229 = pneg %p143
        %p230 = scmp.eq.s32.totalorder %s20, 0
        // Predicated region
        $region45: #{tpu_custom_call.1} parent=39 // pred_check
          %p231 = pneg %p230
        $region46: #{tpu_custom_call.1} parent=39 // pred_check_branch
          %233 = sbr.rel (%p231) target = $region48
        $region47: #{tpu_custom_call.1} parent=39 // pred_region
          %vm234 = vcmask 254976
          %235 = vst.msk [vmem:[#allocation2] sm:$0x3] %vm234, 0.0
        $region48: #{tpu_custom_call.1} parent=39 // pred_fallthru
          _
        %v236 = vld [vmem:[#allocation2] sm:$0x3]
        %v237 = vld [vmem:[%s208] sm:$0xff]
        %v238 = vld [vmem:[%s208 + $0x8] sm:$0xff]
        %v239 = vld [vmem:[%s208 + $0x10] sm:$0xff]
        %v240 = vld [vmem:[%s208 + $0x18] sm:$0xff]
        %v241 = vld [vmem:[%s208 + $0x20] sm:$0xff]
        %v242 = vld [vmem:[%s208 + $0x28] sm:$0xff]
        %v243 = vld [vmem:[%s208 + $0x30] sm:$0xff]
        %v244 = vld [vmem:[%s208 + $0x38] sm:$0xff]
        %245 = vadd.xlane.f32.xlu0 %v237
        %v246 = vpop.xlane.xlu0 %245
        %247 = vadd.xlane.f32.xlu0 %v238
        %v248 = vpop.xlane.xlu0 %247
        %249 = vadd.xlane.f32.xlu0 %v239
        %v250 = vpop.xlane.xlu0 %249
        %251 = vadd.xlane.f32.xlu0 %v240
        %v252 = vpop.xlane.xlu0 %251
        %253 = vadd.xlane.f32.xlu0 %v241
        %v254 = vpop.xlane.xlu0 %253
        %255 = vadd.xlane.f32.xlu0 %v242
        %v256 = vpop.xlane.xlu0 %255
        %257 = vadd.xlane.f32.xlu0 %v243
        %v258 = vpop.xlane.xlu0 %257
        %259 = vadd.xlane.f32.xlu0 %v244
        %v260 = vpop.xlane.xlu0 %259
        %v269 = vlaneseq
        %v270 = vand.u32 %v269, 127
        %v271 = vlaneseq
        %v272 = vshrl.u32 %v271, 7
        %v273 = vsub.s32 %v270, %v272
        %v274 = vrot.slane %v246, %v273
        %v275 = vadd.s32 %v270, 4294967288
        %v276 = vlaneseq
        %v277 = vshrl.u32 %v276, 7
        %v278 = vsub.s32 %v275, %v277
        %v279 = vrot.slane %v248, %v278
        %vm280 = vcmask 130112
        %v281 = vsel %vm280, %v279, %v274
        %v282 = vadd.s32 %v270, 4294967280
        %v283 = vlaneseq
        %v284 = vshrl.u32 %v283, 7
        %v285 = vsub.s32 %v282, %v284
        %v286 = vrot.slane %v250, %v285
        %vm287 = vcmask 195712
        %v288 = vsel %vm287, %v286, %v281
        %v289 = vadd.s32 %v270, 4294967272
        %v290 = vlaneseq
        %v291 = vshrl.u32 %v290, 7
        %v292 = vsub.s32 %v289, %v291
        %v293 = vrot.slane %v252, %v292
        %vm294 = vcmask 261312
        %v295 = vsel %vm294, %v293, %v288
        %v296 = vlaneseq
        %v297 = vshrl.u32 %v296, 7
        %v298 = vsub.s32 %v270, %v297
        %v299 = vrot.slane %v254, %v298
        %v300 = vlaneseq
        %v301 = vshrl.u32 %v300, 7
        %v302 = vsub.s32 %v275, %v301
        %v303 = vrot.slane %v256, %v302
        %v304 = vsel %vm280, %v303, %v299
        %v305 = vlaneseq
        %v306 = vshrl.u32 %v305, 7
        %v307 = vsub.s32 %v282, %v306
        %v308 = vrot.slane %v258, %v307
        %v309 = vsel %vm287, %v308, %v304
        %v310 = vlaneseq
        %v311 = vshrl.u32 %v310, 7
        %v312 = vsub.s32 %v289, %v311
        %v313 = vrot.slane %v260, %v312
        %v314 = vsel %vm294, %v313, %v309
        %vm315 = vcmask 1041409
        %v316 = vsel %vm315, %v314, %v295
        %v318 = vadd.f32 %v236, %v316
        %vm319 = vcmask 254976
        %320 = vst.msk [vmem:[#allocation2] sm:$0x3] %vm319, %v318
        %p321 = scmp.eq.s32.totalorder %s20, 1
        // Predicated region
        $region49: #{tpu_custom_call.1} parent=39 // pred_check
          %p322 = pneg %p321
        $region50: #{tpu_custom_call.1} parent=39 // pred_check_branch
          %324 = sbr.rel (%p322) target = $region52
        $region51: #{tpu_custom_call.1} parent=39 // pred_region
          %v325 = vld [vmem:[#allocation2] sm:$0x3]
          %v326 = vmul.f32 %v325, 0.00390625
          %v327 = vld [vmem:[%s1] sm:$0xff]
          %v328 = vld [vmem:[%s1 + $0x8] sm:$0xff]
          %v329 = vld [vmem:[%s1 + $0x10] sm:$0xff]
          %v330 = vld [vmem:[%s1 + $0x18] sm:$0xff]
          %v331 = vld [vmem:[%s2] sm:$0x1]
          %v333 = vlaneseq
          %v334 = vshrl.u32 %v333, 7
          %v335 = vsub.s32 0, %v334
          %v336 = vrot.slane %v331, %v335
          %vm338 = vcmask 261120
          %v340 = vsel %vm338, %v326, 0
          %342 = vmatprep.subr.mxu0 0.0
          %343 = vmatpush1.msra.mxu0 %v327
          %344 = vmatprep.subr.mxu0 0.0
          %345 = vmatpush1.msra.mxu0 %v328
          %346 = vmatprep.subr.mxu0 0.0
          %347 = vmatpush1.msra.mxu0 %v329
          %348 = vmatprep.subr.mxu0 0.0
          %349 = vmatpush1.msra.mxu0 %v330
          %350 = vmatprep.subr.mxu0 0.0
          %351 = vmatpush1.msra.mxu0 0.0
          %352 = vmatprep.subr.mxu0 0.0
          %353 = vmatpush1.msra.mxu0 0.0
          %354 = vmatprep.subr.mxu0 0.0
          %355 = vmatpush1.msra.mxu0 0.0
          %356 = vmatprep.subr.mxu0 0.0
          %357 = vmatpush1.msra.mxu0 0.0
          %358 = vmatprep.subr.mxu0 0.0
          %359 = vmatpush1.msra.mxu0 0.0
          %360 = vmatprep.subr.mxu0 0.0
          %361 = vmatpush1.msra.mxu0 0.0
          %362 = vmatprep.subr.mxu0 0.0
          %363 = vmatpush1.msra.mxu0 0.0
          %364 = vmatprep.subr.mxu0 0.0
          %365 = vmatpush1.msra.mxu0 0.0
          %366 = vmatprep.subr.mxu0 0.0
          %367 = vmatpush1.msra.mxu0 0.0
          %368 = vmatprep.subr.mxu0 0.0
          %369 = vmatpush1.msra.mxu0 0.0
          %370 = vmatprep.subr.mxu0 0.0
          %371 = vmatpush1.msra.mxu0 0.0
          %372 = vmatprep.subr.mxu0 0.0
          %373 = vmatpush1.msra.mxu0 0.0
          %374 = vmatprep.subr.mxu0 0.0
          %375 = vmatpush1.msra.mxu0 0.0
          %376 = vmatprep.subr.mxu0 0.0
          %377 = vmatpush1.msra.mxu0 0.0
          %378 = vmatprep.subr.mxu0 0.0
          %379 = vmatpush1.msra.mxu0 0.0
          %380 = vmatprep.subr.mxu0 0.0
          %381 = vmatpush1.msra.mxu0 0.0
          %382 = vmatprep.subr.mxu0 0.0
          %383 = vmatpush1.msra.mxu0 0.0
          %384 = vmatprep.subr.mxu0 0.0
          %385 = vmatpush1.msra.mxu0 0.0
          %386 = vmatprep.subr.mxu0 0.0
          %387 = vmatpush1.msra.mxu0 0.0
          %388 = vmatprep.subr.mxu0 0.0
          %389 = vmatpush1.msra.mxu0 0.0
          %390 = vmatprep.subr.mxu0 0.0
          %391 = vmatpush1.msra.mxu0 0.0
          %392 = vmatprep.subr.mxu0 0.0
          %393 = vmatpush1.msra.mxu0 0.0
          %394 = vmatprep.subr.mxu0 0.0
          %395 = vmatpush1.msra.mxu0 0.0
          %396 = vmatprep.subr.mxu0 0.0
          %397 = vmatpush1.msra.mxu0 0.0
          %398 = vmatprep.subr.mxu0 0.0
          %399 = vmatpush1.msra.mxu0 0.0
          %400 = vmatprep.subr.mxu0 0.0
          %401 = vmatpush1.msra.mxu0 0.0
          %402 = vmatprep.subr.mxu0 0.0
          %403 = vmatpush1.msra.mxu0 0.0
          %404 = vmatprep.subr.mxu0 0.0
          %405 = vmatpush1.msra.mxu0 0.0
          %406 = vmatprep.mubr.f32.mxu0 0.0
          %407 = vmatmul.mubr.f32.gmra.mrb[0].mxu0 %v340
          %v408 = vpop.f32.mrb[0].mxu0
          %v409 = vadd.f32 %v336, %v408
          %v410 = vpop.f32.mrb[0].mxu0
          %411 = vdwg.mxu0
          %v412 = vmax.f32 %v409, 0.0
          %v413 = vld [vmem:[%s3] sm:$0xff]
          %v414 = vld [vmem:[%s4] sm:$0x1]
          %v416 = vlaneseq
          %v417 = vshrl.u32 %v416, 7
          %v418 = vsub.s32 0, %v417
          %v419 = vrot.slane %v414, %v418
          %vm421 = vcmask 64512
          %v423 = vsel %vm421, %v412, 0
          %425 = vmatprep.subr.mxu0 0.0
          %426 = vmatpush1.msra.mxu0 %v413
          %427 = vmatprep.subr.mxu0 0.0
          %428 = vmatpush1.msra.mxu0 0.0
          %429 = vmatprep.subr.mxu0 0.0
          %430 = vmatpush1.msra.mxu0 0.0
          %431 = vmatprep.subr.mxu0 0.0
          %432 = vmatpush1.msra.mxu0 0.0
          %433 = vmatprep.subr.mxu0 0.0
          %434 = vmatpush1.msra.mxu0 0.0
          %435 = vmatprep.subr.mxu0 0.0
          %436 = vmatpush1.msra.mxu0 0.0
          %437 = vmatprep.subr.mxu0 0.0
          %438 = vmatpush1.msra.mxu0 0.0
          %439 = vmatprep.subr.mxu0 0.0
          %440 = vmatpush1.msra.mxu0 0.0
          %441 = vmatprep.subr.mxu0 0.0
          %442 = vmatpush1.msra.mxu0 0.0
          %443 = vmatprep.subr.mxu0 0.0
          %444 = vmatpush1.msra.mxu0 0.0
          %445 = vmatprep.subr.mxu0 0.0
          %446 = vmatpush1.msra.mxu0 0.0
          %447 = vmatprep.subr.mxu0 0.0
          %448 = vmatpush1.msra.mxu0 0.0
          %449 = vmatprep.subr.mxu0 0.0
          %450 = vmatpush1.msra.mxu0 0.0
          %451 = vmatprep.subr.mxu0 0.0
          %452 = vmatpush1.msra.mxu0 0.0
          %453 = vmatprep.subr.mxu0 0.0
          %454 = vmatpush1.msra.mxu0 0.0
          %455 = vmatprep.subr.mxu0 0.0
          %456 = vmatpush1.msra.mxu0 0.0
          %457 = vmatprep.subr.mxu0 0.0
          %458 = vmatpush1.msra.mxu0 0.0
          %459 = vmatprep.subr.mxu0 0.0
          %460 = vmatpush1.msra.mxu0 0.0
          %461 = vmatprep.subr.mxu0 0.0
          %462 = vmatpush1.msra.mxu0 0.0
          %463 = vmatprep.subr.mxu0 0.0
          %464 = vmatpush1.msra.mxu0 0.0
          %465 = vmatprep.subr.mxu0 0.0
          %466 = vmatpush1.msra.mxu0 0.0
          %467 = vmatprep.subr.mxu0 0.0
          %468 = vmatpush1.msra.mxu0 0.0
          %469 = vmatprep.subr.mxu0 0.0
          %470 = vmatpush1.msra.mxu0 0.0
          %471 = vmatprep.subr.mxu0 0.0
          %472 = vmatpush1.msra.mxu0 0.0
          %473 = vmatprep.subr.mxu0 0.0
          %474 = vmatpush1.msra.mxu0 0.0
          %475 = vmatprep.subr.mxu0 0.0
          %476 = vmatpush1.msra.mxu0 0.0
          %477 = vmatprep.subr.mxu0 0.0
          %478 = vmatpush1.msra.mxu0 0.0
          %479 = vmatprep.subr.mxu0 0.0
          %480 = vmatpush1.msra.mxu0 0.0
          %481 = vmatprep.subr.mxu0 0.0
          %482 = vmatpush1.msra.mxu0 0.0
          %483 = vmatprep.subr.mxu0 0.0
          %484 = vmatpush1.msra.mxu0 0.0
          %485 = vmatprep.subr.mxu0 0.0
          %486 = vmatpush1.msra.mxu0 0.0
          %487 = vmatprep.subr.mxu0 0.0
          %488 = vmatpush1.msra.mxu0 0.0
          %489 = vmatprep.mubr.f32.mxu0 0.0
          %490 = vmatmul.mubr.f32.gmra.mrb[0].mxu0 %v423
          %v491 = vpop.f32.mrb[0].mxu0
          %v492 = vadd.f32 %v419, %v491
          %v493 = vpop.f32.mrb[0].mxu0
          %494 = vdwg.mxu0
          %v495 = vxor.u32 %v492, 2147483648
          %v496 = vmul.f32 %v495, 1.442695
          %v497 = vpow.pop %v496
          %v498 = vadd.f32 %v497, 1.0
          %v499 = vrcp.pop %v498
          %v500 = vmul.f32 1.0, %v499
          %501 = vst.msk [vmem:[#allocation6] sm:$0x3] %vm319, %v500
        $region52: #{tpu_custom_call.1} parent=39 // pred_fallthru
          _
        // Predicated region
        $region53: #{tpu_custom_call.1} parent=39 // pred_check
          %p502 = pneg %p143
        $region54: #{tpu_custom_call.1} parent=39 // pred_check_branch
          %504 = sbr.rel (%p502) target = $region56
        $region55: #{tpu_custom_call.1} parent=39 // pred_region
          %s506 = ssub.s32 32, 32
          %507 = vsyncadd [#allocation5], %s506
          %s509 = sshll.u32 [#allocation6], 4
          %s510 = int_to_ptr.vmem [resolvable:$true] %s509
          %512 = dma.vmem_to_hbm [thread:$0]  %s510, 32, %s5, [#allocation5]
        $region56: #{tpu_custom_call.1} parent=39 // pred_fallthru
          _
        // Predicated region
        $region57: #{tpu_custom_call.1} parent=39 // pred_check
          %p513 = pneg %p143
        $region58: #{tpu_custom_call.1} parent=39 // pred_check_branch
          %515 = sbr.rel (%p513) target = $region60
        $region59: #{tpu_custom_call.1} parent=39 // pred_region
          %516 = dma.done [#allocation5], 32
        $region60: #{tpu_custom_call.1} parent=39 // pred_fallthru
          _
      $region40: #{tpu_custom_call.1} parent=5 // pred_fallthru
        _
      %p517 = scmp.le.s32.totalorder 2, %s15
      // Predicated region
      $region61: #{tpu_custom_call.1} parent=5 // pred_check
        %p518 = pneg %p517
      $region62: #{tpu_custom_call.1} parent=5 // pred_check_branch
        %520 = sbr.rel (%p518) target = $region64
      $region63: #{tpu_custom_call.1} parent=5 // pred_region
        %s521 = ssub.s32 %s15, 2
      $region64: #{tpu_custom_call.1} parent=5 // pred_fallthru
        _
    $region6: #{tpu_custom_call.1} parent=1 // loop_footer
      %s19 = sadd.s32 1, %s15
    $region7: #{tpu_custom_call.1} parent=1 // loop_footer_branch
      %14 = sbr.rel target = $region3
    $region8: #{tpu_custom_call.1} parent=1 // loop_exit
      _
    %522 = vsyncpa [#allocation4], 1
    %s523 = scalar_lea.sflag [#allocation4], 1
    %524 = vsyncpa %s523, 1
    %525 = vsyncpa [#allocation5], 1
    %s526 = scalar_lea.sflag [#allocation5], 1
    %527 = vsyncpa %s526, 1

</llo_original>
